<compile_context>
chip_gen: v5e
topology: v5e:2x2
jax: 0.10.0
libtpu: 0.0.40
codegen_flags: <defaults>
</compile_context>

<pallas_src>
import jax
import jax.numpy as jnp
from jax.experimental import pallas as pl
from jax.experimental.pallas import tpu as pltpu


def _round_up(n, m):
    return ((n + m - 1) // m) * m


def rendezvous_reward_kernel(xT_ref, uT_ref, mq_ref, mr_ref, out_ref):
    xT = xT_ref[...].astype(jnp.float32)      # (8, TILE_B)  batch on lanes
    uT = uT_ref[...].astype(jnp.float32)      # (4, TILE_B)
    MQ = mq_ref[...].astype(jnp.float32)      # (8, 8)   == (S @ Q @ S^T)^T
    MR = mr_ref[...].astype(jnp.float32)      # (4, 4)   == R^T

    # cost_x[b] = x[b] @ (S Q S^T) @ x[b]^T, in feature-major form.
    qx = jnp.dot(MQ, xT, preferred_element_type=jnp.float32)   # (8, TILE_B) MXU
    cost_x = jnp.sum(qx * xT, axis=0, keepdims=True)           # (1, TILE_B)

    # cost_u[b] = u[b] @ R @ u[b]^T
    ru = jnp.dot(MR, uT, preferred_element_type=jnp.float32)   # (4, TILE_B) MXU
    cost_u = jnp.sum(ru * uT, axis=0, keepdims=True)           # (1, TILE_B)

    out_ref[...] = (-(cost_x + cost_u)).astype(out_ref.dtype)  # lane-dense store


def rendezvous_reward(x, u, Q, R, *, tile_b=2048):
    """Matches RendezvousReward.forward(x, u) semantics."""
    dtype = Q.dtype
    x = x.astype(dtype)
    u = u.astype(dtype)
    if x.ndim == 1:
        x = x[None, :]
    if u.ndim == 1:
        u = u[None, :]
    B = x.shape[0]

    # Selection matrix S: x @ S == cat(x[:, :2], x[:, 4:6]) - cat(x[:, 2:4], x[:, 6:8]).
    S = jnp.zeros((8, 4), dtype=jnp.float32)
    S = S.at[0, 0].set(1.0).at[1, 1].set(1.0)
    S = S.at[4, 2].set(1.0).at[5, 3].set(1.0)
    S = S.at[2, 0].set(-1.0).at[3, 1].set(-1.0)
    S = S.at[6, 2].set(-1.0).at[7, 3].set(-1.0)

    # Fold S and Q into a single 8x8 matrix (transposed for feature-major layout).
    Qf = Q.astype(jnp.float32)
    Rf = R.astype(jnp.float32)
    MQ = (S @ Qf @ S.T).T                     # (8, 8)
    MR = Rf.T                                 # (4, 4)

    # Feature-major, batch padded to a multiple of TILE_B (TILE_B multiple of 128).
    TILE_B = min(tile_b, _round_up(B, 128))
    B_pad = _round_up(B, TILE_B)
    xT = jnp.zeros((8, B_pad), dtype=dtype).at[:, :B].set(x.T)
    uT = jnp.zeros((4, B_pad), dtype=dtype).at[:, :B].set(u.T)

    itemsize = jnp.dtype(dtype).itemsize
    cost = pl.CostEstimate(
        flops=2 * B_pad * (8 * 8 + 4 * 4) + 3 * B_pad * (8 + 4),
        transcendentals=0,
        bytes_accessed=B_pad * (8 + 4 + 1) * itemsize + (64 + 16) * 4,
    )

    out = pl.pallas_call(
        rendezvous_reward_kernel,
        out_shape=jax.ShapeDtypeStruct((1, B_pad), dtype),
        grid=(B_pad // TILE_B,),
        in_specs=[
            pl.BlockSpec((8, TILE_B), lambda i: (0, i)),   # x^T tiles over batch
            pl.BlockSpec((4, TILE_B), lambda i: (0, i)),   # u^T tiles over batch
            pl.BlockSpec((8, 8), lambda i: (0, 0)),        # MQ, resident
            pl.BlockSpec((4, 4), lambda i: (0, 0)),        # MR, resident
        ],
        out_specs=pl.BlockSpec((1, TILE_B), lambda i: (0, i)),
        compiler_params=pltpu.CompilerParams(
            dimension_semantics=("parallel",)),
        cost_estimate=cost,
    )(xT, uT, MQ, MR)

    return out[0, :B]                          # (B,)


if __name__ == "__main__":
    key = jax.random.PRNGKey(0)
    kx, ku = jax.random.split(key)

    B = 2
    x = jax.random.normal(kx, (B, 8), dtype=jnp.float32)
    u = jax.random.normal(ku, (B, 4), dtype=jnp.float32)

    # Module defaults: Q = I4, R = I4.
    Q = jnp.eye(4, dtype=jnp.float32)
    R = jnp.eye(4, dtype=jnp.float32)

    reward = rendezvous_reward(x, u, Q, R)
    reward = jax.block_until_ready(reward)

    # Pure-JAX reference for correctness.
    s1 = jnp.concatenate([x[:, :2], x[:, 4:6]], -1)
    s2 = jnp.concatenate([x[:, 2:4], x[:, 6:8]], -1)
    delta = s1 - s2
    ref = -(jnp.sum((delta @ Q) * delta, -1) + jnp.sum((u @ R) * u, -1))
    assert reward.shape == (B,)
    assert jnp.allclose(reward, ref, atol=1e-5), (reward, ref)

    print("KERNEL_OK")
</pallas_src>

<mosaic_0001>
module attributes {stable_mosaic.version = 11 : i64} {
  func.func @rendezvous_reward_kernel(%arg0: i32, %arg1: memref<8x128xf32, #tpu.memory_space<vmem>>, %arg2: memref<4x128xf32, #tpu.memory_space<vmem>>, %arg3: memref<8x8xf32, #tpu.memory_space<vmem>>, %arg4: memref<4x4xf32, #tpu.memory_space<vmem>>, %arg5: memref<1x128xf32, #tpu.memory_space<vmem>>) attributes {dimension_semantics = [#tpu.dimension_semantics<parallel>], iteration_bounds = array<i64: 1>, scalar_prefetch = 0 : i64, scratch_operands = 0 : i64, tpu.core_type = #tpu.core_type<tc>, window_params = [{transform_indices = @transform_0, window_bounds = array<i64: 8, 128>}, {transform_indices = @transform_1, window_bounds = array<i64: 4, 128>}, {pipeline_mode = #tpu.pipeline_mode<synchronous>, transform_indices = @transform_2, window_bounds = array<i64: 8, 8>}, {pipeline_mode = #tpu.pipeline_mode<synchronous>, transform_indices = @transform_3, window_bounds = array<i64: 4, 4>}, {transform_indices = @transform_4, window_bounds = array<i64: 1, 128>}]} {
    %c0 = arith.constant 0 : index
    %c0_0 = arith.constant 0 : index
    %0 = vector.load %arg1[%c0, %c0_0] : memref<8x128xf32, #tpu.memory_space<vmem>>, vector<8x128xf32>
    %c0_1 = arith.constant 0 : index
    %c0_2 = arith.constant 0 : index
    %1 = vector.load %arg2[%c0_1, %c0_2] : memref<4x128xf32, #tpu.memory_space<vmem>>, vector<4x128xf32>
    %c0_3 = arith.constant 0 : index
    %c0_4 = arith.constant 0 : index
    %2 = vector.load %arg3[%c0_3, %c0_4] : memref<8x8xf32, #tpu.memory_space<vmem>>, vector<8x8xf32>
    %c0_5 = arith.constant 0 : index
    %c0_6 = arith.constant 0 : index
    %3 = vector.load %arg4[%c0_5, %c0_6] : memref<4x4xf32, #tpu.memory_space<vmem>>, vector<4x4xf32>
    %cst = arith.constant dense<0.000000e+00> : vector<8x128xf32>
    %4 = tpu.matmul %2, %0, %cst {dimension_numbers = #tpu.dot_dimension_numbers<[1], [0], [0], [1], [0, 0, 1, 1], [], []>} : vector<8x8xf32>, vector<8x128xf32>, vector<8x128xf32> -> vector<8x128xf32>
    %5 = arith.mulf %4, %0 : vector<8x128xf32>
    %cst_7 = arith.constant dense<0.000000e+00> : vector<128xf32>
    %6 = vector.multi_reduction <add>, %5, %cst_7 [0] : vector<8x128xf32> to vector<128xf32>
    %7 = vector.shape_cast %6 : vector<128xf32> to vector<1x128xf32>
    %cst_8 = arith.constant dense<0.000000e+00> : vector<4x128xf32>
    %8 = tpu.matmul %3, %1, %cst_8 {dimension_numbers = #tpu.dot_dimension_numbers<[1], [0], [0], [1], [0, 0, 1, 1], [], []>} : vector<4x4xf32>, vector<4x128xf32>, vector<4x128xf32> -> vector<4x128xf32>
    %9 = arith.mulf %8, %1 : vector<4x128xf32>
    %cst_9 = arith.constant dense<0.000000e+00> : vector<128xf32>
    %10 = vector.multi_reduction <add>, %9, %cst_9 [0] : vector<4x128xf32> to vector<128xf32>
    %11 = vector.shape_cast %10 : vector<128xf32> to vector<1x128xf32>
    %12 = arith.addf %7, %11 : vector<1x128xf32>
    %cst_10 = arith.constant 0.000000e+00 : f32
    %13 = vector.broadcast %cst_10 : f32 to vector<1x128xf32>
    %14 = arith.subf %13, %12 : vector<1x128xf32>
    %c0_11 = arith.constant 0 : index
    %c0_12 = arith.constant 0 : index
    %15 = vector.load %arg5[%c0_11, %c0_12] : memref<1x128xf32, #tpu.memory_space<vmem>>, vector<1x128xf32>
    tpu.vector_store %arg5[%c0_11, %c0_12], %14 {strides = array<i32>} : memref<1x128xf32, #tpu.memory_space<vmem>>, vector<1x128xf32>,
    return
  }
  func.func @transform_0(%arg0: i32) -> (i32, i32) {
    %c0_i32 = arith.constant 0 : i32
    %c0_i32_0 = arith.constant 0 : i32
    return %c0_i32, %arg0 : i32, i32
  }
  func.func @transform_1(%arg0: i32) -> (i32, i32) {
    %c0_i32 = arith.constant 0 : i32
    %c0_i32_0 = arith.constant 0 : i32
    return %c0_i32, %arg0 : i32, i32
  }
  func.func @transform_2(%arg0: i32) -> (i32, i32) {
    %c0_i32 = arith.constant 0 : i32
    %c0_i32_0 = arith.constant 0 : i32
    %c0_i32_1 = arith.constant 0 : i32
    return %c0_i32, %c0_i32_0 : i32, i32
  }
  func.func @transform_3(%arg0: i32) -> (i32, i32) {
    %c0_i32 = arith.constant 0 : i32
    %c0_i32_0 = arith.constant 0 : i32
    %c0_i32_1 = arith.constant 0 : i32
    return %c0_i32, %c0_i32_0 : i32, i32
  }
  func.func @transform_4(%arg0: i32) -> (i32, i32) {
    %c0_i32 = arith.constant 0 : i32
    %c0_i32_0 = arith.constant 0 : i32
    return %c0_i32, %arg0 : i32, i32
  }
}

</mosaic_0001>

<llo_original>
// kernel: tpu_custom_call.1
$region0: #{tpu_custom_call.1}
  #allocation0 [shape = 'u32[]', space=smem, size = 0x4, offset = 0x4, fixed_abs, tag = 'smem constant byte address 0x4 - core index']
  #allocation1 [shape = 'u32[72,128]{1,0:T(1,128)}', space=vmem, size = 0x9000, scoped, tag = 'internal scratch']
  %s0 = inlined_call_operand.hbm [shape: f32[8,128], index: 0, kind: input, shape index: {}]
  %s1 = inlined_call_operand.hbm [shape: f32[4,128], index: 1, kind: input, shape index: {}]
  %s2 = inlined_call_operand.hbm [shape: f32[8,8], index: 2, kind: input, shape index: {}]
  %s3 = inlined_call_operand.hbm [shape: f32[4,4], index: 3, kind: input, shape index: {}]
  %s4 = inlined_call_operand.hbm [shape: f32[1,128], index: 4, kind: output, shape index: {}]
  %s5 = sld [smem:[#allocation0]]
  $region42: #{tpu_custom_call.1} parent=0
    _
  %s7 = ssub.s32 1, %s5
  %s8 = scalar_select 0, %s7, %s5
  $region1: #{tpu_custom_call.1} parent=0
    #allocation2 [shape = 'u8[4096]{0}', space=vmem, size = 0x1000, scoped, tag = 'input window, operand 0, single buffered']
    #allocation3 [shape = 's32[1]{0}', space=sflag, size = 0x4, scoped, tag = 'scoped memory for tpu_custom_call.1']
    #allocation4 [shape = 's32[1]{0}', space=sflag, size = 0x4, scoped, tag = 'scoped memory for tpu_custom_call.1']
    #allocation5 [shape = 'u8[2048]{0}', space=vmem, size = 0x800, scoped, tag = 'input window, operand 1, single buffered']
    #allocation6 [shape = 's32[1]{0}', space=sflag, size = 0x4, scoped, tag = 'scoped memory for tpu_custom_call.1']
    #allocation7 [shape = 'u8[4096]{0}', space=vmem, size = 0x1000, scoped, tag = 'input window, operand 2, single buffered']
    #allocation8 [shape = 'u8[2048]{0}', space=vmem, size = 0x800, scoped, tag = 'input window, operand 3, single buffered']
    #allocation9 [shape = 's32[1]{0}', space=sflag, size = 0x4, scoped, tag = 'scoped memory for tpu_custom_call.1']
    #allocation10 [shape = 'u8[512]{0}', space=vmem, size = 0x400, scoped, tag = 'output window, operand 0, single buffered']
    %9 = vsyncpa [#allocation3], 0
    %10 = vsyncpa [#allocation6], 0
    %11 = vsyncpa [#allocation9], 0
    %12 = vsyncpa [#allocation4], 0
    // Predicated region
    $region2: #{tpu_custom_call.1} parent=1 // pred_check
      _
    $region3: #{tpu_custom_call.1} parent=1 // pred_check_branch
      %14 = sbr.rel (0) target = $region5
    $region4: #{tpu_custom_call.1} parent=1 // pred_region
      %16 = vsyncadd [#allocation3], 0
      %s18 = sshll.u32 %s0, 4
      %s19 = int_to_ptr.hbm [resolvable:$true] %s18
      %s20 = sshll.u32 [#allocation2], 4
      %s21 = int_to_ptr.vmem [resolvable:$true] %s20
      %23 = dma.hbm_to_vmem [thread:$0]  %s19, 128, %s21, [#allocation3]
    $region5: #{tpu_custom_call.1} parent=1 // pred_fallthru
      _
    // Predicated region
    $region6: #{tpu_custom_call.1} parent=1 // pred_check
      _
    $region7: #{tpu_custom_call.1} parent=1 // pred_check_branch
      %25 = sbr.rel (0) target = $region9
    $region8: #{tpu_custom_call.1} parent=1 // pred_region
      %27 = vsyncadd [#allocation6], 0
      %s29 = sshll.u32 %s1, 4
      %s30 = int_to_ptr.hbm [resolvable:$true] %s29
      %s31 = sshll.u32 [#allocation5], 4
      %s32 = int_to_ptr.vmem [resolvable:$true] %s31
      %34 = dma.hbm_to_vmem [thread:$0]  %s30, 64, %s32, [#allocation6]
    $region9: #{tpu_custom_call.1} parent=1 // pred_fallthru
      _
    // Predicated region
    $region10: #{tpu_custom_call.1} parent=1 // pred_check
      _
    $region11: #{tpu_custom_call.1} parent=1 // pred_check_branch
      %36 = sbr.rel (0) target = $region13
    $region12: #{tpu_custom_call.1} parent=1 // pred_region
      %38 = vsyncadd [#allocation6], 0
      %s40 = sshll.u32 %s2, 4
      %s41 = int_to_ptr.hbm [resolvable:$true] %s40
      %s42 = sshll.u32 [#allocation7], 4
      %s43 = int_to_ptr.vmem [resolvable:$true] %s42
      %45 = dma.hbm_to_vmem [thread:$0]  %s41, 128, %s43, [#allocation6]
    $region13: #{tpu_custom_call.1} parent=1 // pred_fallthru
      _
    // Predicated region
    $region14: #{tpu_custom_call.1} parent=1 // pred_check
      _
    $region15: #{tpu_custom_call.1} parent=1 // pred_check_branch
      %47 = sbr.rel (0) target = $region17
    $region16: #{tpu_custom_call.1} parent=1 // pred_region
      %49 = vsyncadd [#allocation9], 0
      %s51 = sshll.u32 %s3, 4
      %s52 = int_to_ptr.hbm [resolvable:$true] %s51
      %s53 = sshll.u32 [#allocation8], 4
      %s54 = int_to_ptr.vmem [resolvable:$true] %s53
      %56 = dma.hbm_to_vmem [thread:$0]  %s52, 64, %s54, [#allocation9]
    $region17: #{tpu_custom_call.1} parent=1 // pred_fallthru
      _
    // Predicated region
    $region18: #{tpu_custom_call.1} parent=1 // pred_check
      _
    $region19: #{tpu_custom_call.1} parent=1 // pred_check_branch
      %58 = sbr.rel (0) target = $region21
    $region20: #{tpu_custom_call.1} parent=1 // pred_region
      %60 = dma.done [#allocation3], 128
    $region21: #{tpu_custom_call.1} parent=1 // pred_fallthru
      _
    // Predicated region
    $region22: #{tpu_custom_call.1} parent=1 // pred_check
      _
    $region23: #{tpu_custom_call.1} parent=1 // pred_check_branch
      %62 = sbr.rel (0) target = $region25
    $region24: #{tpu_custom_call.1} parent=1 // pred_region
      %64 = dma.done [#allocation6], 64
    $region25: #{tpu_custom_call.1} parent=1 // pred_fallthru
      _
    // Predicated region
    $region26: #{tpu_custom_call.1} parent=1 // pred_check
      _
    $region27: #{tpu_custom_call.1} parent=1 // pred_check_branch
      %66 = sbr.rel (0) target = $region29
    $region28: #{tpu_custom_call.1} parent=1 // pred_region
      %68 = dma.done [#allocation6], 128
    $region29: #{tpu_custom_call.1} parent=1 // pred_fallthru
      _
    // Predicated region
    $region30: #{tpu_custom_call.1} parent=1 // pred_check
      _
    $region31: #{tpu_custom_call.1} parent=1 // pred_check_branch
      %70 = sbr.rel (0) target = $region33
    $region32: #{tpu_custom_call.1} parent=1 // pred_region
      %72 = dma.done [#allocation9], 64
    $region33: #{tpu_custom_call.1} parent=1 // pred_fallthru
      _
    %v73 = vld [vmem:[#allocation2] sm:$0xff]
    %v74 = vld [vmem:[#allocation5] sm:$0xf]
    %v75 = vld [vmem:[#allocation7] sm:$0xff]
    %v76 = vld [vmem:[#allocation8] sm:$0xf]
    %vm77 = vcmask 64512
    %v79 = vsel %vm77, %v75, 0
    %81 = vmatpush.msra.mxu0 0.0
    %82 = vmatpush.msra.mxu0 0.0
    %83 = vmatpush.msra.mxu0 0.0
    %84 = vmatpush.msra.mxu0 0.0
    %85 = vmatpush.msra.mxu0 0.0
    %86 = vmatpush.msra.mxu0 0.0
    %87 = vmatpush.msra.mxu0 0.0
    %88 = vmatpush.msra.mxu0 0.0
    %89 = vmatpush.msra.mxu0 0.0
    %90 = vmatpush.msra.mxu0 0.0
    %91 = vmatpush.msra.mxu0 0.0
    %92 = vmatpush.msra.mxu0 0.0
    %93 = vmatpush.msra.mxu0 0.0
    %94 = vmatpush.msra.mxu0 0.0
    %95 = vmatpush.msra.mxu0 0.0
    %96 = vmatpush.msra.mxu0 %v73
    %97 = vmatmul.f32.gmra.mxu0 %v79
    %v98 = vpop.f32.mrf.mxu0
    %v99 = vadd.f32 0.0, %v98
    %100 = vdwg.mxu0
    %v101 = vmul.f32 %v99, %v73
    %v102 = vrot.slane %v101, 4
    %v103 = vadd.f32 %v101, %v102
    %v104 = vrot.slane %v103, 2
    %v105 = vadd.f32 %v103, %v104
    %v106 = vrot.slane %v105, 1
    %v107 = vadd.f32 %v105, %v106
    %vm108 = vcmask 31744
    %v110 = vsel %vm108, %v76, 0
    %vm112 = vcmask 1043456
    %v114 = vsel %vm112, %v74, 0
    %116 = vmatpush.msra.mxu0 0.0
    %117 = vmatpush.msra.mxu0 0.0
    %118 = vmatpush.msra.mxu0 0.0
    %119 = vmatpush.msra.mxu0 0.0
    %120 = vmatpush.msra.mxu0 0.0
    %121 = vmatpush.msra.mxu0 0.0
    %122 = vmatpush.msra.mxu0 0.0
    %123 = vmatpush.msra.mxu0 0.0
    %124 = vmatpush.msra.mxu0 0.0
    %125 = vmatpush.msra.mxu0 0.0
    %126 = vmatpush.msra.mxu0 0.0
    %127 = vmatpush.msra.mxu0 0.0
    %128 = vmatpush.msra.mxu0 0.0
    %129 = vmatpush.msra.mxu0 0.0
    %130 = vmatpush.msra.mxu0 0.0
    %131 = vmatpush.msra.mxu0 %v114
    %132 = vmatmul.f32.gmra.mxu0 %v110
    %v133 = vpop.f32.mrf.mxu0
    %v134 = vadd.f32 0.0, %v133
    %135 = vdwg.mxu0
    %v136 = vmul.f32 %v134, %v74
    %v137 = vsel %vm112, %v136, 0.0
    %v138 = vrot.slane %v137, 4
    %v139 = vadd.f32 %v137, %v138
    %v140 = vrot.slane %v139, 2
    %v141 = vadd.f32 %v139, %v140
    %v142 = vrot.slane %v141, 1
    %v143 = vadd.f32 %v141, %v142
    %v144 = vadd.f32 %v107, %v143
    %v145 = vsub.f32 0.0, %v144
    %146 = vst [vmem:[#allocation10] sm:$0x1] %v145
    // Predicated region
    $region34: #{tpu_custom_call.1} parent=1 // pred_check
      _
    $region35: #{tpu_custom_call.1} parent=1 // pred_check_branch
      %148 = sbr.rel (0) target = $region37
    $region36: #{tpu_custom_call.1} parent=1 // pred_region
      %150 = vsyncadd [#allocation4], 0
      %s152 = sshll.u32 [#allocation10], 4
      %s153 = int_to_ptr.vmem [resolvable:$true] %s152
      %s154 = sshll.u32 %s4, 4
      %s155 = int_to_ptr.hbm [resolvable:$true] %s154
      %157 = dma.vmem_to_hbm [thread:$0]  %s153, 16, %s155, [#allocation4]
    $region37: #{tpu_custom_call.1} parent=1 // pred_fallthru
      _
    // Predicated region
    $region38: #{tpu_custom_call.1} parent=1 // pred_check
      _
    $region39: #{tpu_custom_call.1} parent=1 // pred_check_branch
      %159 = sbr.rel (0) target = $region41
    $region40: #{tpu_custom_call.1} parent=1 // pred_region
      %161 = dma.done [#allocation4], 16
    $region41: #{tpu_custom_call.1} parent=1 // pred_fallthru
      _
    %162 = vsyncpa [#allocation3], 1
    %163 = vsyncpa [#allocation6], 1
    %164 = vsyncpa [#allocation9], 1
    %165 = vsyncpa [#allocation4], 1

</llo_original>
